<compile_context>
chip_gen: v7x
topology: tpu7x:2x2x1
jax: 0.10.0
libtpu: 0.0.40
codegen_flags: <defaults>
</compile_context>

<pallas_src>
import jax
import jax.numpy as jnp
from jax.experimental import pallas as pl
from jax.experimental.pallas import tpu as pltpu


# Tiling / VMEM policy (conservative for v7x: 64 MiB physical, 32 MiB scoped).
_VMEM_LIMIT_BYTES = 32 << 20       # explicit scoped-VMEM limit for the call
_VMEM_TILE_BUDGET = 20 << 20       # budget for all double-buffered tiles
_MAX_TILE_ROWS = 16384             # >= ~1 MiB bf16 x DMA per step at D=32
_SINGLE_STEP_MAX_ROWS = 4096       # below this, don't split the grid at all


def _round_up(a: int, b: int) -> int:
    return (a + b - 1) // b * b


def _auto_batch_tile(B: int, D: int, O: int, has_mask: bool,
                     return_probs: bool) -> int:
    """Pick a batch tile: big enough to amortize per-step overhead, small
    enough that every double-buffered stream fits the v7x VMEM budget."""
    per_row = 2 * (2 * D)                    # x tile, bf16, double-buffered
    per_row += 2 * (4 * O)                   # logits tile, f32, double-buffered
    if has_mask:
        per_row += 2 * (1 * O)               # int8 mask tile
    if return_probs:
        per_row += 2 * (2 * O)               # bf16 probs tile
    resident = 2 * D * O + 4 * O             # W^T (bf16) + bias (f32), resident
    rows_budget = max(8, ((_VMEM_TILE_BUDGET - resident) // per_row) // 8 * 8)

    if B <= _SINGLE_STEP_MAX_ROWS:
        # Tiny, memory-bound problem: one grid step, no cross-core split.
        tile = _round_up(B, 8)
    else:
        # >= 4 steps so both v7x TensorCores get >= 2 steps of pipelining.
        tile = _round_up(pl.cdiv(B, 4), 8)
    tile = min(tile, _MAX_TILE_ROWS, rows_budget)
    return max(8, (tile // 8) * 8)


def _make_heads_kernel(has_mask: bool, return_probs: bool):
    """Builds a kernel specialized (at trace time) on mask/probs presence."""

    def kernel(*refs):
        x_ref, w_ref, b_ref = refs[0], refs[1], refs[2]
        pos = 3
        mask_ref = None
        if has_mask:
            mask_ref = refs[pos]
            pos += 1
        logits_ref = refs[pos]
        probs_ref = refs[pos + 1] if return_probs else None

        # Linear: y = x @ W^T + b. bf16 operands, f32 accumulation (single-pass
        # on the bf16-native MXU); bias add in f32.
        y = jnp.dot(x_ref[...], w_ref[...], preferred_element_type=jnp.float32)
        y = y + b_ref[...]                      # (1, O) broadcasts over rows

        if mask_ref is not None:
            # available_actions == 0 -> -1e10. Widen i8 -> i32 before the
            # compare for robust lowering; select stays in f32.
            m32 = mask_ref[...].astype(jnp.int32)
            y = jnp.where(m32 == 0, -1e10, y)

        # Log-softmax epilogue, all f32 (v5e has no bf16 VPU/EUP). Single exp
        # pass; e is reused for the optional probs output.
        m = jnp.max(y, axis=-1, keepdims=True)
        e = jnp.exp(y - m)
        s = jnp.sum(e, axis=-1, keepdims=True)
        logits_ref[...] = y - (m + jnp.log(s))

        if probs_ref is not None:
            # Approx reciprocal runs on the otherwise-idle EUP slot; probs are
            # stored bf16 (halves the second output stream).
            probs_ref[...] = (e * pl.reciprocal(s, approx=True)).astype(probs_ref.dtype)

    return kernel


def heads_forward(x, weight_t, bias, available_actions=None, *,
                  batch_tile=None, return_probs=False):
    """Pallas implementation of Heads.forward.

    Args:
      x: (B, D) activations (any float dtype; streamed to the kernel as bf16).
      weight_t: (D, O) — the nn.Linear weight PRE-TRANSPOSED once at init.
      bias: (O,) float.
      available_actions: optional (B, O) 0/1 mask (0 => action disallowed);
        carried into the kernel as int8.
      batch_tile: optional batch-tile override (multiple of 8 rows).
      return_probs: also emit softmax probs (bf16) from the kernel.

    Returns:
      normalized logits (B, O) f32, or (logits, probs) if return_probs — the
      contents of the FixedCategorical distribution the torch module returns.

    Precision note: x/W^T are rounded to bf16 before the MXU matmul (f32
    accumulation, f32 epilogue); this deviates from torch's f32 Linear by
    bf16 input rounding.
    """
    B, D = x.shape
    O = weight_t.shape[1]

    x = x.astype(jnp.bfloat16)                  # dominant read stream -> bf16
    w_t = weight_t.astype(jnp.bfloat16)
    b2 = bias.reshape(1, O).astype(jnp.float32)
    mask = None
    if available_actions is not None:
        mask = available_actions.astype(jnp.int8)   # 0/1 contract, 4x < f32

    if batch_tile is None:
        batch_tile = _auto_batch_tile(B, D, O, mask is not None, return_probs)
    tb = int(batch_tile)
    assert tb > 0 and tb % 8 == 0, "batch_tile must be a positive multiple of 8"

    Bp = _round_up(B, tb)
    if Bp != B:
        pad = Bp - B
        x = jnp.pad(x, ((0, pad), (0, 0)))
        if mask is not None:
            mask = jnp.pad(mask, ((0, pad), (0, 0)), constant_values=1)

    grid = (Bp // tb,)

    in_specs = [
        pl.BlockSpec((tb, D), lambda i: (i, 0)),   # x tile (bf16, pipelined)
        pl.BlockSpec((D, O), lambda i: (0, 0)),    # W^T (bf16, VMEM-resident)
        pl.BlockSpec((1, O), lambda i: (0, 0)),    # bias (f32, VMEM-resident)
    ]
    args = [x, w_t, b2]
    if mask is not None:
        in_specs.append(pl.BlockSpec((tb, O), lambda i: (i, 0)))  # int8 mask
        args.append(mask)

    out_shape = [jax.ShapeDtypeStruct((Bp, O), jnp.float32)]
    out_specs = [pl.BlockSpec((tb, O), lambda i: (i, 0))]
    if return_probs:
        out_shape.append(jax.ShapeDtypeStruct((Bp, O), jnp.bfloat16))
        out_specs.append(pl.BlockSpec((tb, O), lambda i: (i, 0)))

    kernel = _make_heads_kernel(has_mask=mask is not None,
                                return_probs=return_probs)

    outs = pl.pallas_call(
        kernel,
        out_shape=out_shape,
        grid_spec=pltpu.PrefetchScalarGridSpec(
            num_scalar_prefetch=0,
            grid=grid,
            in_specs=in_specs,
            out_specs=out_specs,
        ),
        compiler_params=pltpu.CompilerParams(
            dimension_semantics=("parallel",),
            vmem_limit_bytes=_VMEM_LIMIT_BYTES,
        ),
    )(*args)

    if Bp != B:
        outs = [o[:B] for o in outs]
    if return_probs:
        return outs[0], outs[1]
    return outs[0]


class FixedCategoricalJax:
    """JAX stand-in for FixedCategorical (glue, not kernel code).

    torch.distributions.Categorical(logits=y) stores y - logsumexp(y); probs
    is a lazy property — mirrored here so the kernel only has to emit logits.
    """

    def __init__(self, logits, probs=None):
        self.logits = logits          # already normalized (log-softmax)
        self._probs = probs

    @property
    def probs(self):
        if self._probs is None:
            self._probs = jnp.exp(self.logits)
        return self._probs

    def sample(self, key):
        return jax.random.categorical(key, self.logits, axis=-1)[..., None]

    def log_probs(self, actions):
        a = actions.squeeze(-1)
        lp = jnp.take_along_axis(self.logits, a[..., None], axis=-1)
        return lp.reshape(actions.shape[0], -1).sum(-1)[..., None]


def init_heads_params(key, input_dim, out_dim):
    """nn.Linear default init; returns the weight pre-transposed to (D, O)."""
    kw, kb = jax.random.split(key)
    bound = 1.0 / float(input_dim) ** 0.5
    weight = jax.random.uniform(kw, (out_dim, input_dim), jnp.float32, -bound, bound)
    bias = jax.random.uniform(kb, (out_dim,), jnp.float32, -bound, bound)
    # Transpose hoisted here (once), not in the per-call forward path.
    return weight.T, bias


if __name__ == "__main__":
    key = jax.random.PRNGKey(0)
    k_param, k_x, k_mask, k_sample = jax.random.split(key, 4)

    B, D, O = 256, 32, 16

    w_t, bias = init_heads_params(k_param, D, O)
    x = jax.random.normal(k_x, (B, D), jnp.float32)
    # Quantize test inputs through bf16 so the bf16 kernel streams are lossless
    # and the reference comparison stays tight on real hardware.
    x = x.astype(jnp.bfloat16).astype(jnp.float32)
    w_t = w_t.astype(jnp.bfloat16).astype(jnp.float32)
    bias = bias.astype(jnp.bfloat16).astype(jnp.float32)

    # Some unavailable actions (0 => masked to -1e10); action 0 always available.
    available = (jax.random.uniform(k_mask, (B, O)) > 0.3).astype(jnp.int8)
    available = available.at[:, 0].set(1)

    # Default path: masked, normalized logits only (single grid step here).
    logits = heads_forward(x, w_t, bias, available)
    # Optional in-kernel probs (bf16, approx reciprocal).
    logits2, probs2 = heads_forward(x, w_t, bias, available, return_probs=True)
    # No-mask variant (no mask bytes read, no select).
    logits_nm = heads_forward(x, w_t, bias, None)
    # Multi-step + padded-batch path (250 rows, 64-row tiles -> 4 grid steps).
    logits_mt = heads_forward(x[:250], w_t, bias, available[:250], batch_tile=64)
    jax.block_until_ready((logits, logits2, probs2, logits_nm, logits_mt))

    # Pure-JAX reference of the torch semantics.
    y = jnp.dot(x, w_t, precision=jax.lax.Precision.HIGHEST) + bias
    y_m = jnp.where(available == 0, -1e10, y)
    logits_ref = y_m - jax.nn.logsumexp(y_m, axis=-1, keepdims=True)
    probs_ref = jax.nn.softmax(y_m, axis=-1)
    logits_nm_ref = y - jax.nn.logsumexp(y, axis=-1, keepdims=True)

    assert jnp.allclose(logits, logits_ref, atol=1e-4), "masked logits mismatch"
    assert jnp.allclose(logits2, logits_ref, atol=1e-4), "masked logits (probs path) mismatch"
    assert jnp.allclose(probs2.astype(jnp.float32), probs_ref, atol=1e-2), "probs mismatch"
    assert jnp.allclose(logits_nm, logits_nm_ref, atol=1e-4), "no-mask logits mismatch"
    assert jnp.allclose(logits_mt, logits_ref[:250], atol=1e-4), "multi-tile logits mismatch"

    # Exercise the distribution wrapper (glue).
    distribution = FixedCategoricalJax(logits)
    actions = distribution.sample(k_sample)
    lp = distribution.log_probs(actions)
    jax.block_until_ready((actions, lp, distribution.probs))

    print("KERNEL_OK")
</pallas_src>

<mosaic_0001>
module attributes {stable_mosaic.version = 11 : i64} {
  func.func @kernel(%arg0: i32, %arg1: memref<256x32xbf16, #tpu.memory_space<vmem>>, %arg2: memref<32x16xbf16, #tpu.memory_space<vmem>>, %arg3: memref<1x16xf32, #tpu.memory_space<vmem>>, %arg4: memref<256x16xi8, #tpu.memory_space<vmem>>, %arg5: memref<256x16xf32, #tpu.memory_space<vmem>>) attributes {dimension_semantics = [#tpu.dimension_semantics<parallel>], iteration_bounds = array<i64: 1>, scalar_prefetch = 0 : i64, scratch_operands = 0 : i64, tpu.core_type = #tpu.core_type<tc>, window_params = [{transform_indices = @transform_0, window_bounds = array<i64: 256, 32>}, {pipeline_mode = #tpu.pipeline_mode<synchronous>, transform_indices = @transform_1, window_bounds = array<i64: 32, 16>}, {pipeline_mode = #tpu.pipeline_mode<synchronous>, transform_indices = @transform_2, window_bounds = array<i64: 1, 16>}, {transform_indices = @transform_3, window_bounds = array<i64: 256, 16>}, {transform_indices = @transform_4, window_bounds = array<i64: 256, 16>}]} {
    %c0 = arith.constant 0 : index
    %c0_0 = arith.constant 0 : index
    %0 = vector.load %arg1[%c0, %c0_0] : memref<256x32xbf16, #tpu.memory_space<vmem>>, vector<256x32xbf16>
    %c0_1 = arith.constant 0 : index
    %c0_2 = arith.constant 0 : index
    %1 = vector.load %arg2[%c0_1, %c0_2] : memref<32x16xbf16, #tpu.memory_space<vmem>>, vector<32x16xbf16>
    %cst = arith.constant dense<0.000000e+00> : vector<256x16xf32>
    %2 = tpu.matmul %0, %1, %cst {dimension_numbers = #tpu.dot_dimension_numbers<[1], [0], [0], [1], [0, 0, 1, 1], [], []>} : vector<256x32xbf16>, vector<32x16xbf16>, vector<256x16xf32> -> vector<256x16xf32>
    %c0_3 = arith.constant 0 : index
    %c0_4 = arith.constant 0 : index
    %3 = vector.load %arg3[%c0_3, %c0_4] : memref<1x16xf32, #tpu.memory_space<vmem>>, vector<1x16xf32>
    %4 = vector.broadcast %3 : vector<1x16xf32> to vector<256x16xf32>
    %5 = arith.addf %2, %4 : vector<256x16xf32>
    %c0_5 = arith.constant 0 : index
    %c0_6 = arith.constant 0 : index
    %6 = vector.load %arg4[%c0_5, %c0_6] : memref<256x16xi8, #tpu.memory_space<vmem>>, vector<256x16xi8>
    %7 = arith.extsi %6 : vector<256x16xi8> to vector<256x16xi32>
    %c0_i32 = arith.constant 0 : i32
    %8 = vector.broadcast %c0_i32 : i32 to vector<256x16xi32>
    %9 = arith.cmpi eq, %7, %8 : vector<256x16xi32>
    %cst_7 = arith.constant -1.000000e+10 : f32
    %10 = vector.broadcast %cst_7 : f32 to vector<256x16xf32>
    %11 = arith.select %9, %10, %5 : vector<256x16xi1>, vector<256x16xf32>
    %cst_8 = arith.constant dense<0xFF800000> : vector<256xf32>
    %12 = vector.multi_reduction <maximumf>, %11, %cst_8 [1] : vector<256x16xf32> to vector<256xf32>
    %13 = vector.shape_cast %12 : vector<256xf32> to vector<256x1xf32>
    %14 = vector.broadcast %13 : vector<256x1xf32> to vector<256x16xf32>
    %15 = arith.subf %11, %14 : vector<256x16xf32>
    %16 = math.exp %15 : vector<256x16xf32>
    %cst_9 = arith.constant dense<0.000000e+00> : vector<256xf32>
    %17 = vector.multi_reduction <add>, %16, %cst_9 [1] : vector<256x16xf32> to vector<256xf32>
    %18 = vector.shape_cast %17 : vector<256xf32> to vector<256x1xf32>
    %19 = math.log %18 : vector<256x1xf32>
    %20 = arith.addf %13, %19 : vector<256x1xf32>
    %21 = vector.broadcast %20 : vector<256x1xf32> to vector<256x16xf32>
    %22 = arith.subf %11, %21 : vector<256x16xf32>
    %c0_10 = arith.constant 0 : index
    %c0_11 = arith.constant 0 : index
    %23 = vector.load %arg5[%c0_10, %c0_11] : memref<256x16xf32, #tpu.memory_space<vmem>>, vector<256x16xf32>
    tpu.vector_store %arg5[%c0_10, %c0_11], %22 {strides = array<i32>} : memref<256x16xf32, #tpu.memory_space<vmem>>, vector<256x16xf32>,
    return
  }
  func.func @transform_0(%arg0: i32) -> (i32, i32) {
    %c0_i32 = arith.constant 0 : i32
    %c0_i32_0 = arith.constant 0 : i32
    return %arg0, %c0_i32 : i32, i32
  }
  func.func @transform_1(%arg0: i32) -> (i32, i32) {
    %c0_i32 = arith.constant 0 : i32
    %c0_i32_0 = arith.constant 0 : i32
    %c0_i32_1 = arith.constant 0 : i32
    return %c0_i32, %c0_i32_0 : i32, i32
  }
  func.func @transform_2(%arg0: i32) -> (i32, i32) {
    %c0_i32 = arith.constant 0 : i32
    %c0_i32_0 = arith.constant 0 : i32
    %c0_i32_1 = arith.constant 0 : i32
    return %c0_i32, %c0_i32_0 : i32, i32
  }
  func.func @transform_3(%arg0: i32) -> (i32, i32) {
    %c0_i32 = arith.constant 0 : i32
    %c0_i32_0 = arith.constant 0 : i32
    return %arg0, %c0_i32 : i32, i32
  }
  func.func @transform_4(%arg0: i32) -> (i32, i32) {
    %c0_i32 = arith.constant 0 : i32
    %c0_i32_0 = arith.constant 0 : i32
    return %arg0, %c0_i32 : i32, i32
  }
}

</mosaic_0001>

<llo_original>
// kernel: tpu_custom_call.1
$region0: #{tpu_custom_call.1}
  #allocation0 [shape = 'u32[]', space=smem, size = 0x4, offset = 0x4, fixed_abs, tag = 'smem constant byte address 0x4 - core index']
  #allocation1 [shape = 'u32[144,128]{1,0:T(1,128)}', space=vmem, size = 0x12000, scoped, tag = 'internal scratch']
  %s0 = inlined_call_operand.vmem [shape: bf16[256,32], index: 0, kind: input, shape index: {}]
  %s1 = inlined_call_operand.vmem [shape: bf16[32,16], index: 1, kind: input, shape index: {}]
  %s2 = inlined_call_operand.vmem [shape: f32[1,16], index: 2, kind: input, shape index: {}]
  %s3 = inlined_call_operand.vmem [shape: s8[256,16], index: 3, kind: input, shape index: {}]
  %s4 = inlined_call_operand.vmem [shape: f32[256,16], index: 4, kind: output, shape index: {}]
  %s5 = sld [smem:[#allocation0]]
  $region26: #{tpu_custom_call.1} parent=0
    _
  %s7 = ssub.s32 1, %s5
  %s8 = scalar_select 0, %s7, %s5
  // Predicated region
  $region2: #{tpu_custom_call.1} parent=0 // pred_check
    _
  $region3: #{tpu_custom_call.1} parent=0 // pred_check_branch
    %10 = sbr.rel (0) target = $region5
  $region4: #{tpu_custom_call.1} parent=0 // pred_region
    _
  $region5: #{tpu_custom_call.1} parent=0 // pred_fallthru
    _
  // Predicated region
  $region6: #{tpu_custom_call.1} parent=0 // pred_check
    _
  $region7: #{tpu_custom_call.1} parent=0 // pred_check_branch
    %12 = sbr.rel (0) target = $region9
  $region8: #{tpu_custom_call.1} parent=0 // pred_region
    _
  $region9: #{tpu_custom_call.1} parent=0 // pred_fallthru
    _
  // Predicated region
  $region10: #{tpu_custom_call.1} parent=0 // pred_check
    _
  $region11: #{tpu_custom_call.1} parent=0 // pred_check_branch
    %14 = sbr.rel (0) target = $region13
  $region12: #{tpu_custom_call.1} parent=0 // pred_region
    _
  $region13: #{tpu_custom_call.1} parent=0 // pred_fallthru
    _
  // Predicated region
  $region14: #{tpu_custom_call.1} parent=0 // pred_check
    _
  $region15: #{tpu_custom_call.1} parent=0 // pred_check_branch
    %16 = sbr.rel (0) target = $region17
  $region16: #{tpu_custom_call.1} parent=0 // pred_region
    _
  $region17: #{tpu_custom_call.1} parent=0 // pred_fallthru
    _
  %v18 = vld [vmem:[%s0] sm:$0xf]
  %v19 = vld [vmem:[%s0 + $0x4] sm:$0xf]
  %v20 = vld [vmem:[%s0 + $0x8] sm:$0xf]
  %v21 = vld [vmem:[%s0 + $0xc] sm:$0xf]
  %v22 = vld [vmem:[%s0 + $0x10] sm:$0xf]
  %v23 = vld [vmem:[%s0 + $0x14] sm:$0xf]
  %v24 = vld [vmem:[%s0 + $0x18] sm:$0xf]
  %v25 = vld [vmem:[%s0 + $0x1c] sm:$0xf]
  %v26 = vld [vmem:[%s0 + $0x20] sm:$0xf]
  %v27 = vld [vmem:[%s0 + $0x24] sm:$0xf]
  %v28 = vld [vmem:[%s0 + $0x28] sm:$0xf]
  %v29 = vld [vmem:[%s0 + $0x2c] sm:$0xf]
  %v30 = vld [vmem:[%s0 + $0x30] sm:$0xf]
  %v31 = vld [vmem:[%s0 + $0x34] sm:$0xf]
  %v32 = vld [vmem:[%s0 + $0x38] sm:$0xf]
  %v33 = vld [vmem:[%s0 + $0x3c] sm:$0xf]
  %v34 = vld [vmem:[%s0 + $0x40] sm:$0xf]
  %v35 = vld [vmem:[%s0 + $0x44] sm:$0xf]
  %v36 = vld [vmem:[%s0 + $0x48] sm:$0xf]
  %v37 = vld [vmem:[%s0 + $0x4c] sm:$0xf]
  %v38 = vld [vmem:[%s0 + $0x50] sm:$0xf]
  %v39 = vld [vmem:[%s0 + $0x54] sm:$0xf]
  %v40 = vld [vmem:[%s0 + $0x58] sm:$0xf]
  %v41 = vld [vmem:[%s0 + $0x5c] sm:$0xf]
  %v42 = vld [vmem:[%s0 + $0x60] sm:$0xf]
  %v43 = vld [vmem:[%s0 + $0x64] sm:$0xf]
  %v44 = vld [vmem:[%s0 + $0x68] sm:$0xf]
  %v45 = vld [vmem:[%s0 + $0x6c] sm:$0xf]
  %v46 = vld [vmem:[%s0 + $0x70] sm:$0xf]
  %v47 = vld [vmem:[%s0 + $0x74] sm:$0xf]
  %v48 = vld [vmem:[%s0 + $0x78] sm:$0xf]
  %v49 = vld [vmem:[%s0 + $0x7c] sm:$0xf]
  %v50 = vld [vmem:[%s1] sm:$0xf]
  %v51 = vld [vmem:[%s1 + $0x4] sm:$0xf]
  %v52 = vld [vmem:[%s1 + $0x8] sm:$0xf]
  %v53 = vld [vmem:[%s1 + $0xc] sm:$0xf]
  %v54 = vld [vmem:[%s2] sm:$0x1]
  %v56 = vlaneseq
  %v57 = vshrl.u32 %v56, 7
  %v58 = vsub.s32 0, %v57
  %v59 = vrot.slane %v54, %v58
  %v93 = vunpack.c.l.b16 %v18
  %v94 = vunpack.c.l.b16 %v19
  %v95 = vunpack.c.l.b16 %v20
  %v96 = vunpack.c.l.b16 %v21
  %v97 = vunpack.c.l.b16 %v22
  %v98 = vunpack.c.l.b16 %v23
  %v99 = vunpack.c.l.b16 %v24
  %v100 = vunpack.c.l.b16 %v25
  %v101 = vunpack.c.l.b16 %v26
  %v102 = vunpack.c.l.b16 %v27
  %v103 = vunpack.c.l.b16 %v28
  %v104 = vunpack.c.l.b16 %v29
  %v105 = vunpack.c.l.b16 %v30
  %v106 = vunpack.c.l.b16 %v31
  %v107 = vunpack.c.l.b16 %v32
  %v108 = vunpack.c.l.b16 %v33
  %v109 = vunpack.c.l.b16 %v34
  %v110 = vunpack.c.l.b16 %v35
  %v111 = vunpack.c.l.b16 %v36
  %v112 = vunpack.c.l.b16 %v37
  %v113 = vunpack.c.l.b16 %v38
  %v114 = vunpack.c.l.b16 %v39
  %v115 = vunpack.c.l.b16 %v40
  %v116 = vunpack.c.l.b16 %v41
  %v117 = vunpack.c.l.b16 %v42
  %v118 = vunpack.c.l.b16 %v43
  %v119 = vunpack.c.l.b16 %v44
  %v120 = vunpack.c.l.b16 %v45
  %v121 = vunpack.c.l.b16 %v46
  %v122 = vunpack.c.l.b16 %v47
  %v123 = vunpack.c.l.b16 %v48
  %v124 = vunpack.c.l.b16 %v49
  %v125 = vpack.c.b16 %v94, %v93
  %v126 = vpack.c.b16 %v96, %v95
  %v127 = vpack.c.b16 %v98, %v97
  %v128 = vpack.c.b16 %v100, %v99
  %v129 = vpack.c.b16 %v102, %v101
  %v130 = vpack.c.b16 %v104, %v103
  %v131 = vpack.c.b16 %v106, %v105
  %v132 = vpack.c.b16 %v108, %v107
  %v133 = vpack.c.b16 %v110, %v109
  %v134 = vpack.c.b16 %v112, %v111
  %v135 = vpack.c.b16 %v114, %v113
  %v136 = vpack.c.b16 %v116, %v115
  %v137 = vpack.c.b16 %v118, %v117
  %v138 = vpack.c.b16 %v120, %v119
  %v139 = vpack.c.b16 %v122, %v121
  %v140 = vpack.c.b16 %v124, %v123
  %v145 = vunpack.c.l.b16 %v50
  %v146 = vunpack.c.l.b16 %v51
  %v147 = vunpack.c.l.b16 %v52
  %v148 = vunpack.c.l.b16 %v53
  %v149 = vpack.c.b16 %v146, %v145
  %v150 = vpack.c.b16 %v148, %v147
  %vm153 = vcmask 261120
  %v155 = vsel %vm153, %v125, 0
  %v158 = vsel %vm153, %v126, 0
  %v161 = vsel %vm153, %v127, 0
  %v164 = vsel %vm153, %v128, 0
  %v167 = vsel %vm153, %v129, 0
  %v170 = vsel %vm153, %v130, 0
  %v173 = vsel %vm153, %v131, 0
  %v176 = vsel %vm153, %v132, 0
  %v179 = vsel %vm153, %v133, 0
  %v182 = vsel %vm153, %v134, 0
  %v185 = vsel %vm153, %v135, 0
  %v188 = vsel %vm153, %v136, 0
  %v191 = vsel %vm153, %v137, 0
  %v194 = vsel %vm153, %v138, 0
  %v197 = vsel %vm153, %v139, 0
  %v200 = vsel %vm153, %v140, 0
  %202 = vmatprep.subr.bf16.mxu0 0
  %203 = vmatpush1.bf16.msra.mxu0 %v149
  %204 = vmatprep.subr.bf16.mxu0 0
  %205 = vmatpush1.bf16.msra.mxu0 %v150
  %206 = vmatprep.subr.bf16.mxu0 0
  %207 = vmatpush1.bf16.msra.mxu0 0
  %208 = vmatprep.subr.bf16.mxu0 0
  %209 = vmatpush1.bf16.msra.mxu0 0
  %210 = vmatprep.subr.bf16.mxu0 0
  %211 = vmatpush1.bf16.msra.mxu0 0
  %212 = vmatprep.subr.bf16.mxu0 0
  %213 = vmatpush1.bf16.msra.mxu0 0
  %214 = vmatprep.subr.bf16.mxu0 0
  %215 = vmatpush1.bf16.msra.mxu0 0
  %216 = vmatprep.subr.bf16.mxu0 0
  %217 = vmatpush1.bf16.msra.mxu0 0
  %218 = vmatprep.subr.bf16.mxu0 0
  %219 = vmatpush1.bf16.msra.mxu0 0
  %220 = vmatprep.subr.bf16.mxu0 0
  %221 = vmatpush1.bf16.msra.mxu0 0
  %222 = vmatprep.subr.bf16.mxu0 0
  %223 = vmatpush1.bf16.msra.mxu0 0
  %224 = vmatprep.subr.bf16.mxu0 0
  %225 = vmatpush1.bf16.msra.mxu0 0
  %226 = vmatprep.subr.bf16.mxu0 0
  %227 = vmatpush1.bf16.msra.mxu0 0
  %228 = vmatprep.subr.bf16.mxu0 0
  %229 = vmatpush1.bf16.msra.mxu0 0
  %230 = vmatprep.subr.bf16.mxu0 0
  %231 = vmatpush1.bf16.msra.mxu0 0
  %232 = vmatprep.subr.bf16.mxu0 0
  %233 = vmatpush1.bf16.msra.mxu0 0
  %234 = vmatprep.mubr.bf16.mxu0 0
  %235 = vmatmul.mubr.bf16.gmra.mrb[0].mxu0 %v155
  %v236 = vpop.f32.mrb[0].mxu0
  %v237 = vadd.f32 %v59, %v236
  %v238 = vpop.f32.mrb[0].mxu0
  %v239 = vpop.f32.mrb[0].mxu0
  %v240 = vadd.f32 %v59, %v239
  %v241 = vpop.f32.mrb[0].mxu0
  %242 = vmatprep.mubr.bf16.mxu0 0
  %243 = vmatmul.mubr.bf16.gmra.mrb[0].mxu0 %v158
  %v244 = vpop.f32.mrb[0].mxu0
  %v245 = vadd.f32 %v59, %v244
  %v246 = vpop.f32.mrb[0].mxu0
  %v247 = vpop.f32.mrb[0].mxu0
  %v248 = vadd.f32 %v59, %v247
  %v249 = vpop.f32.mrb[0].mxu0
  %250 = vmatprep.mubr.bf16.mxu0 0
  %251 = vmatmul.mubr.bf16.gmra.mrb[0].mxu0 %v161
  %v252 = vpop.f32.mrb[0].mxu0
  %v253 = vadd.f32 %v59, %v252
  %v254 = vpop.f32.mrb[0].mxu0
  %v255 = vpop.f32.mrb[0].mxu0
  %v256 = vadd.f32 %v59, %v255
  %v257 = vpop.f32.mrb[0].mxu0
  %258 = vmatprep.mubr.bf16.mxu0 0
  %259 = vmatmul.mubr.bf16.gmra.mrb[0].mxu0 %v164
  %v260 = vpop.f32.mrb[0].mxu0
  %v261 = vadd.f32 %v59, %v260
  %v262 = vpop.f32.mrb[0].mxu0
  %v263 = vpop.f32.mrb[0].mxu0
  %v264 = vadd.f32 %v59, %v263
  %v265 = vpop.f32.mrb[0].mxu0
  %266 = vmatprep.mubr.bf16.mxu0 0
  %267 = vmatmul.mubr.bf16.gmra.mrb[0].mxu0 %v167
  %v268 = vpop.f32.mrb[0].mxu0
  %v269 = vadd.f32 %v59, %v268
  %v270 = vpop.f32.mrb[0].mxu0
  %v271 = vpop.f32.mrb[0].mxu0
  %v272 = vadd.f32 %v59, %v271
  %v273 = vpop.f32.mrb[0].mxu0
  %274 = vmatprep.mubr.bf16.mxu0 0
  %275 = vmatmul.mubr.bf16.gmra.mrb[0].mxu0 %v170
  %v276 = vpop.f32.mrb[0].mxu0
  %v277 = vadd.f32 %v59, %v276
  %v278 = vpop.f32.mrb[0].mxu0
  %v279 = vpop.f32.mrb[0].mxu0
  %v280 = vadd.f32 %v59, %v279
  %v281 = vpop.f32.mrb[0].mxu0
  %282 = vmatprep.mubr.bf16.mxu0 0
  %283 = vmatmul.mubr.bf16.gmra.mrb[0].mxu0 %v173
  %v284 = vpop.f32.mrb[0].mxu0
  %v285 = vadd.f32 %v59, %v284
  %v286 = vpop.f32.mrb[0].mxu0
  %v287 = vpop.f32.mrb[0].mxu0
  %v288 = vadd.f32 %v59, %v287
  %v289 = vpop.f32.mrb[0].mxu0
  %290 = vmatprep.mubr.bf16.mxu0 0
  %291 = vmatmul.mubr.bf16.gmra.mrb[0].mxu0 %v176
  %v292 = vpop.f32.mrb[0].mxu0
  %v293 = vadd.f32 %v59, %v292
  %v294 = vpop.f32.mrb[0].mxu0
  %v295 = vpop.f32.mrb[0].mxu0
  %v296 = vadd.f32 %v59, %v295
  %v297 = vpop.f32.mrb[0].mxu0
  %298 = vmatprep.mubr.bf16.mxu0 0
  %299 = vmatmul.mubr.bf16.gmra.mrb[0].mxu0 %v179
  %v300 = vpop.f32.mrb[0].mxu0
  %v301 = vadd.f32 %v59, %v300
  %v302 = vpop.f32.mrb[0].mxu0
  %v303 = vpop.f32.mrb[0].mxu0
  %v304 = vadd.f32 %v59, %v303
  %v305 = vpop.f32.mrb[0].mxu0
  %306 = vmatprep.mubr.bf16.mxu0 0
  %307 = vmatmul.mubr.bf16.gmra.mrb[0].mxu0 %v182
  %v308 = vpop.f32.mrb[0].mxu0
  %v309 = vadd.f32 %v59, %v308
  %v310 = vpop.f32.mrb[0].mxu0
  %v311 = vpop.f32.mrb[0].mxu0
  %v312 = vadd.f32 %v59, %v311
  %v313 = vpop.f32.mrb[0].mxu0
  %314 = vmatprep.mubr.bf16.mxu0 0
  %315 = vmatmul.mubr.bf16.gmra.mrb[0].mxu0 %v185
  %v316 = vpop.f32.mrb[0].mxu0
  %v317 = vadd.f32 %v59, %v316
  %v318 = vpop.f32.mrb[0].mxu0
  %v319 = vpop.f32.mrb[0].mxu0
  %v320 = vadd.f32 %v59, %v319
  %v321 = vpop.f32.mrb[0].mxu0
  %322 = vmatprep.mubr.bf16.mxu0 0
  %323 = vmatmul.mubr.bf16.gmra.mrb[0].mxu0 %v188
  %v324 = vpop.f32.mrb[0].mxu0
  %v325 = vadd.f32 %v59, %v324
  %v326 = vpop.f32.mrb[0].mxu0
  %v327 = vpop.f32.mrb[0].mxu0
  %v328 = vadd.f32 %v59, %v327
  %v329 = vpop.f32.mrb[0].mxu0
  %330 = vmatprep.mubr.bf16.mxu0 0
  %331 = vmatmul.mubr.bf16.gmra.mrb[0].mxu0 %v191
  %v332 = vpop.f32.mrb[0].mxu0
  %v333 = vadd.f32 %v59, %v332
  %v334 = vpop.f32.mrb[0].mxu0
  %v335 = vpop.f32.mrb[0].mxu0
  %v336 = vadd.f32 %v59, %v335
  %v337 = vpop.f32.mrb[0].mxu0
  %338 = vmatprep.mubr.bf16.mxu0 0
  %339 = vmatmul.mubr.bf16.gmra.mrb[0].mxu0 %v194
  %v340 = vpop.f32.mrb[0].mxu0
  %v341 = vadd.f32 %v59, %v340
  %v342 = vpop.f32.mrb[0].mxu0
  %v343 = vpop.f32.mrb[0].mxu0
  %v344 = vadd.f32 %v59, %v343
  %v345 = vpop.f32.mrb[0].mxu0
  %346 = vmatprep.mubr.bf16.mxu0 0
  %347 = vmatmul.mubr.bf16.gmra.mrb[0].mxu0 %v197
  %v348 = vpop.f32.mrb[0].mxu0
  %v349 = vadd.f32 %v59, %v348
  %v350 = vpop.f32.mrb[0].mxu0
  %v351 = vpop.f32.mrb[0].mxu0
  %v352 = vadd.f32 %v59, %v351
  %v353 = vpop.f32.mrb[0].mxu0
  %354 = vmatprep.mubr.bf16.mxu0 0
  %355 = vmatmul.mubr.bf16.gmra.mrb[0].mxu0 %v200
  %v356 = vpop.f32.mrb[0].mxu0
  %v357 = vadd.f32 %v59, %v356
  %v358 = vpop.f32.mrb[0].mxu0
  %v359 = vpop.f32.mrb[0].mxu0
  %v360 = vadd.f32 %v59, %v359
  %v361 = vpop.f32.mrb[0].mxu0
  %362 = vdwg.mxu0
  %v363 = vld [vmem:[%s3] sm:$0xff]
  %v364 = vld [vmem:[%s3 + $0x8] sm:$0xff]
  %v365 = vld [vmem:[%s3 + $0x10] sm:$0xff]
  %v366 = vld [vmem:[%s3 + $0x18] sm:$0xff]
  %v367 = vld [vmem:[%s3 + $0x20] sm:$0xff]
  %v368 = vld [vmem:[%s3 + $0x28] sm:$0xff]
  %v369 = vld [vmem:[%s3 + $0x30] sm:$0xff]
  %v370 = vld [vmem:[%s3 + $0x38] sm:$0xff]
  %v371 = vunpack.c.0.s8 %v363
  %v372 = vunpack.c.1.s8 %v363
  %v373 = vunpack.c.2.s8 %v363
  %v374 = vunpack.c.3.s8 %v363
  %v375 = vunpack.c.0.s8 %v364
  %v376 = vunpack.c.1.s8 %v364
  %v377 = vunpack.c.2.s8 %v364
  %v378 = vunpack.c.3.s8 %v364
  %v379 = vunpack.c.0.s8 %v365
  %v380 = vunpack.c.1.s8 %v365
  %v381 = vunpack.c.2.s8 %v365
  %v382 = vunpack.c.3.s8 %v365
  %v383 = vunpack.c.0.s8 %v366
  %v384 = vunpack.c.1.s8 %v366
  %v385 = vunpack.c.2.s8 %v366
  %v386 = vunpack.c.3.s8 %v366
  %v387 = vunpack.c.0.s8 %v367
  %v388 = vunpack.c.1.s8 %v367
  %v389 = vunpack.c.2.s8 %v367
  %v390 = vunpack.c.3.s8 %v367
  %v391 = vunpack.c.0.s8 %v368
  %v392 = vunpack.c.1.s8 %v368
  %v393 = vunpack.c.2.s8 %v368
  %v394 = vunpack.c.3.s8 %v368
  %v395 = vunpack.c.0.s8 %v369
  %v396 = vunpack.c.1.s8 %v369
  %v397 = vunpack.c.2.s8 %v369
  %v398 = vunpack.c.3.s8 %v369
  %v399 = vunpack.c.0.s8 %v370
  %v400 = vunpack.c.1.s8 %v370
  %v401 = vunpack.c.2.s8 %v370
  %v402 = vunpack.c.3.s8 %v370
  %vm403 = vcmp.eq.s32.totalorder %v371, 0
  %vm404 = vcmp.eq.s32.totalorder %v372, 0
  %vm405 = vcmp.eq.s32.totalorder %v373, 0
  %vm406 = vcmp.eq.s32.totalorder %v374, 0
  %vm407 = vcmp.eq.s32.totalorder %v375, 0
  %vm408 = vcmp.eq.s32.totalorder %v376, 0
  %vm409 = vcmp.eq.s32.totalorder %v377, 0
  %vm410 = vcmp.eq.s32.totalorder %v378, 0
  %vm411 = vcmp.eq.s32.totalorder %v379, 0
  %vm412 = vcmp.eq.s32.totalorder %v380, 0
  %vm413 = vcmp.eq.s32.totalorder %v381, 0
  %vm414 = vcmp.eq.s32.totalorder %v382, 0
  %vm415 = vcmp.eq.s32.totalorder %v383, 0
  %vm416 = vcmp.eq.s32.totalorder %v384, 0
  %vm417 = vcmp.eq.s32.totalorder %v385, 0
  %vm418 = vcmp.eq.s32.totalorder %v386, 0
  %vm419 = vcmp.eq.s32.totalorder %v387, 0
  %vm420 = vcmp.eq.s32.totalorder %v388, 0
  %vm421 = vcmp.eq.s32.totalorder %v389, 0
  %vm422 = vcmp.eq.s32.totalorder %v390, 0
  %vm423 = vcmp.eq.s32.totalorder %v391, 0
  %vm424 = vcmp.eq.s32.totalorder %v392, 0
  %vm425 = vcmp.eq.s32.totalorder %v393, 0
  %vm426 = vcmp.eq.s32.totalorder %v394, 0
  %vm427 = vcmp.eq.s32.totalorder %v395, 0
  %vm428 = vcmp.eq.s32.totalorder %v396, 0
  %vm429 = vcmp.eq.s32.totalorder %v397, 0
  %vm430 = vcmp.eq.s32.totalorder %v398, 0
  %vm431 = vcmp.eq.s32.totalorder %v399, 0
  %vm432 = vcmp.eq.s32.totalorder %v400, 0
  %vm433 = vcmp.eq.s32.totalorder %v401, 0
  %vm434 = vcmp.eq.s32.totalorder %v402, 0
  %v435 = vsel %vm403, -1e+10, %v237
  %v436 = vsel %vm404, -1e+10, %v240
  %v437 = vsel %vm405, -1e+10, %v245
  %v438 = vsel %vm406, -1e+10, %v248
  %v439 = vsel %vm407, -1e+10, %v253
  %v440 = vsel %vm408, -1e+10, %v256
  %v441 = vsel %vm409, -1e+10, %v261
  %v442 = vsel %vm410, -1e+10, %v264
  %v443 = vsel %vm411, -1e+10, %v269
  %v444 = vsel %vm412, -1e+10, %v272
  %v445 = vsel %vm413, -1e+10, %v277
  %v446 = vsel %vm414, -1e+10, %v280
  %v447 = vsel %vm415, -1e+10, %v285
  %v448 = vsel %vm416, -1e+10, %v288
  %v449 = vsel %vm417, -1e+10, %v293
  %v450 = vsel %vm418, -1e+10, %v296
  %v451 = vsel %vm419, -1e+10, %v301
  %v452 = vsel %vm420, -1e+10, %v304
  %v453 = vsel %vm421, -1e+10, %v309
  %v454 = vsel %vm422, -1e+10, %v312
  %v455 = vsel %vm423, -1e+10, %v317
  %v456 = vsel %vm424, -1e+10, %v320
  %v457 = vsel %vm425, -1e+10, %v325
  %v458 = vsel %vm426, -1e+10, %v328
  %v459 = vsel %vm427, -1e+10, %v333
  %v460 = vsel %vm428, -1e+10, %v336
  %v461 = vsel %vm429, -1e+10, %v341
  %v462 = vsel %vm430, -1e+10, %v344
  %v463 = vsel %vm431, -1e+10, %v349
  %v464 = vsel %vm432, -1e+10, %v352
  %v465 = vsel %vm433, -1e+10, %v357
  %v466 = vsel %vm434, -1e+10, %v360
  %vm467 = vcmask 130048
  %v468 = vsel %vm467, %v435, -inf
  %469 = vmax.xlane.f32.xlu0 %v468
  %v470 = vpop.xlane.xlu0 %469
  %v471 = vsel %vm467, %v436, -inf
  %472 = vmax.xlane.f32.xlu0 %v471
  %v473 = vpop.xlane.xlu0 %472
  %v474 = vsel %vm467, %v437, -inf
  %475 = vmax.xlane.f32.xlu0 %v474
  %v476 = vpop.xlane.xlu0 %475
  %v477 = vsel %vm467, %v438, -inf
  %478 = vmax.xlane.f32.xlu0 %v477
  %v479 = vpop.xlane.xlu0 %478
  %v480 = vsel %vm467, %v439, -inf
  %481 = vmax.xlane.f32.xlu0 %v480
  %v482 = vpop.xlane.xlu0 %481
  %v483 = vsel %vm467, %v440, -inf
  %484 = vmax.xlane.f32.xlu0 %v483
  %v485 = vpop.xlane.xlu0 %484
  %v486 = vsel %vm467, %v441, -inf
  %487 = vmax.xlane.f32.xlu0 %v486
  %v488 = vpop.xlane.xlu0 %487
  %v489 = vsel %vm467, %v442, -inf
  %490 = vmax.xlane.f32.xlu0 %v489
  %v491 = vpop.xlane.xlu0 %490
  %v492 = vsel %vm467, %v443, -inf
  %493 = vmax.xlane.f32.xlu0 %v492
  %v494 = vpop.xlane.xlu0 %493
  %v495 = vsel %vm467, %v444, -inf
  %496 = vmax.xlane.f32.xlu0 %v495
  %v497 = vpop.xlane.xlu0 %496
  %v498 = vsel %vm467, %v445, -inf
  %499 = vmax.xlane.f32.xlu0 %v498
  %v500 = vpop.xlane.xlu0 %499
  %v501 = vsel %vm467, %v446, -inf
  %502 = vmax.xlane.f32.xlu0 %v501
  %v503 = vpop.xlane.xlu0 %502
  %v504 = vsel %vm467, %v447, -inf
  %505 = vmax.xlane.f32.xlu0 %v504
  %v506 = vpop.xlane.xlu0 %505
  %v507 = vsel %vm467, %v448, -inf
  %508 = vmax.xlane.f32.xlu0 %v507
  %v509 = vpop.xlane.xlu0 %508
  %v510 = vsel %vm467, %v449, -inf
  %511 = vmax.xlane.f32.xlu0 %v510
  %v512 = vpop.xlane.xlu0 %511
  %v513 = vsel %vm467, %v450, -inf
  %514 = vmax.xlane.f32.xlu0 %v513
  %v515 = vpop.xlane.xlu0 %514
  %v516 = vsel %vm467, %v451, -inf
  %517 = vmax.xlane.f32.xlu0 %v516
  %v518 = vpop.xlane.xlu0 %517
  %v519 = vsel %vm467, %v452, -inf
  %520 = vmax.xlane.f32.xlu0 %v519
  %v521 = vpop.xlane.xlu0 %520
  %v522 = vsel %vm467, %v453, -inf
  %523 = vmax.xlane.f32.xlu0 %v522
  %v524 = vpop.xlane.xlu0 %523
  %v525 = vsel %vm467, %v454, -inf
  %526 = vmax.xlane.f32.xlu0 %v525
  %v527 = vpop.xlane.xlu0 %526
  %v528 = vsel %vm467, %v455, -inf
  %529 = vmax.xlane.f32.xlu0 %v528
  %v530 = vpop.xlane.xlu0 %529
  %v531 = vsel %vm467, %v456, -inf
  %532 = vmax.xlane.f32.xlu0 %v531
  %v533 = vpop.xlane.xlu0 %532
  %v534 = vsel %vm467, %v457, -inf
  %535 = vmax.xlane.f32.xlu0 %v534
  %v536 = vpop.xlane.xlu0 %535
  %v537 = vsel %vm467, %v458, -inf
  %538 = vmax.xlane.f32.xlu0 %v537
  %v539 = vpop.xlane.xlu0 %538
  %v540 = vsel %vm467, %v459, -inf
  %541 = vmax.xlane.f32.xlu0 %v540
  %v542 = vpop.xlane.xlu0 %541
  %v543 = vsel %vm467, %v460, -inf
  %544 = vmax.xlane.f32.xlu0 %v543
  %v545 = vpop.xlane.xlu0 %544
  %v546 = vsel %vm467, %v461, -inf
  %547 = vmax.xlane.f32.xlu0 %v546
  %v548 = vpop.xlane.xlu0 %547
  %v549 = vsel %vm467, %v462, -inf
  %550 = vmax.xlane.f32.xlu0 %v549
  %v551 = vpop.xlane.xlu0 %550
  %v552 = vsel %vm467, %v463, -inf
  %553 = vmax.xlane.f32.xlu0 %v552
  %v554 = vpop.xlane.xlu0 %553
  %v555 = vsel %vm467, %v464, -inf
  %556 = vmax.xlane.f32.xlu0 %v555
  %v557 = vpop.xlane.xlu0 %556
  %v558 = vsel %vm467, %v465, -inf
  %559 = vmax.xlane.f32.xlu0 %v558
  %v560 = vpop.xlane.xlu0 %559
  %v561 = vsel %vm467, %v466, -inf
  %562 = vmax.xlane.f32.xlu0 %v561
  %v563 = vpop.xlane.xlu0 %562
  %v564 = vsub.f32 %v435, %v470
  %v565 = vsub.f32 %v436, %v473
  %v566 = vsub.f32 %v437, %v476
  %v567 = vsub.f32 %v438, %v479
  %v568 = vsub.f32 %v439, %v482
  %v569 = vsub.f32 %v440, %v485
  %v570 = vsub.f32 %v441, %v488
  %v571 = vsub.f32 %v442, %v491
  %v572 = vsub.f32 %v443, %v494
  %v573 = vsub.f32 %v444, %v497
  %v574 = vsub.f32 %v445, %v500
  %v575 = vsub.f32 %v446, %v503
  %v576 = vsub.f32 %v447, %v506
  %v577 = vsub.f32 %v448, %v509
  %v578 = vsub.f32 %v449, %v512
  %v579 = vsub.f32 %v450, %v515
  %v580 = vsub.f32 %v451, %v518
  %v581 = vsub.f32 %v452, %v521
  %v582 = vsub.f32 %v453, %v524
  %v583 = vsub.f32 %v454, %v527
  %v584 = vsub.f32 %v455, %v530
  %v585 = vsub.f32 %v456, %v533
  %v586 = vsub.f32 %v457, %v536
  %v587 = vsub.f32 %v458, %v539
  %v588 = vsub.f32 %v459, %v542
  %v589 = vsub.f32 %v460, %v545
  %v590 = vsub.f32 %v461, %v548
  %v591 = vsub.f32 %v462, %v551
  %v592 = vsub.f32 %v463, %v554
  %v593 = vsub.f32 %v464, %v557
  %v594 = vsub.f32 %v465, %v560
  %v595 = vsub.f32 %v466, %v563
  %v596 = vmul.f32 %v564, 1.442695
  %v597 = vpow.pop %v596
  %v598 = vmul.f32 %v565, 1.442695
  %v599 = vpow.pop %v598
  %v600 = vmul.f32 %v566, 1.442695
  %v601 = vpow.pop %v600
  %v602 = vmul.f32 %v567, 1.442695
  %v603 = vpow.pop %v602
  %v604 = vmul.f32 %v568, 1.442695
  %v605 = vpow.pop %v604
  %v606 = vmul.f32 %v569, 1.442695
  %v607 = vpow.pop %v606
  %v608 = vmul.f32 %v570, 1.442695
  %v609 = vpow.pop %v608
  %v610 = vmul.f32 %v571, 1.442695
  %v611 = vpow.pop %v610
  %v612 = vmul.f32 %v572, 1.442695
  %v613 = vpow.pop %v612
  %v614 = vmul.f32 %v573, 1.442695
  %v615 = vpow.pop %v614
  %v616 = vmul.f32 %v574, 1.442695
  %v617 = vpow.pop %v616
  %v618 = vmul.f32 %v575, 1.442695
  %v619 = vpow.pop %v618
  %v620 = vmul.f32 %v576, 1.442695
  %v621 = vpow.pop %v620
  %v622 = vmul.f32 %v577, 1.442695
  %v623 = vpow.pop %v622
  %v624 = vmul.f32 %v578, 1.442695
  %v625 = vpow.pop %v624
  %v626 = vmul.f32 %v579, 1.442695
  %v627 = vpow.pop %v626
  %v628 = vmul.f32 %v580, 1.442695
  %v629 = vpow.pop %v628
  %v630 = vmul.f32 %v581, 1.442695
  %v631 = vpow.pop %v630
  %v632 = vmul.f32 %v582, 1.442695
  %v633 = vpow.pop %v632
  %v634 = vmul.f32 %v583, 1.442695
  %v635 = vpow.pop %v634
  %v636 = vmul.f32 %v584, 1.442695
  %v637 = vpow.pop %v636
  %v638 = vmul.f32 %v585, 1.442695
  %v639 = vpow.pop %v638
  %v640 = vmul.f32 %v586, 1.442695
  %v641 = vpow.pop %v640
  %v642 = vmul.f32 %v587, 1.442695
  %v643 = vpow.pop %v642
  %v644 = vmul.f32 %v588, 1.442695
  %v645 = vpow.pop %v644
  %v646 = vmul.f32 %v589, 1.442695
  %v647 = vpow.pop %v646
  %v648 = vmul.f32 %v590, 1.442695
  %v649 = vpow.pop %v648
  %v650 = vmul.f32 %v591, 1.442695
  %v651 = vpow.pop %v650
  %v652 = vmul.f32 %v592, 1.442695
  %v653 = vpow.pop %v652
  %v654 = vmul.f32 %v593, 1.442695
  %v655 = vpow.pop %v654
  %v656 = vmul.f32 %v594, 1.442695
  %v657 = vpow.pop %v656
  %v658 = vmul.f32 %v595, 1.442695
  %v659 = vpow.pop %v658
  %v660 = vsel %vm467, %v597, 0.0
  %661 = vadd.xlane.f32.xlu0 %v660
  %v662 = vpop.xlane.xlu0 %661
  %v663 = vsel %vm467, %v599, 0.0
  %664 = vadd.xlane.f32.xlu0 %v663
  %v665 = vpop.xlane.xlu0 %664
  %v666 = vsel %vm467, %v601, 0.0
  %667 = vadd.xlane.f32.xlu0 %v666
  %v668 = vpop.xlane.xlu0 %667
  %v669 = vsel %vm467, %v603, 0.0
  %670 = vadd.xlane.f32.xlu0 %v669
  %v671 = vpop.xlane.xlu0 %670
  %v672 = vsel %vm467, %v605, 0.0
  %673 = vadd.xlane.f32.xlu0 %v672
  %v674 = vpop.xlane.xlu0 %673
  %v675 = vsel %vm467, %v607, 0.0
  %676 = vadd.xlane.f32.xlu0 %v675
  %v677 = vpop.xlane.xlu0 %676
  %v678 = vsel %vm467, %v609, 0.0
  %679 = vadd.xlane.f32.xlu0 %v678
  %v680 = vpop.xlane.xlu0 %679
  %v681 = vsel %vm467, %v611, 0.0
  %682 = vadd.xlane.f32.xlu0 %v681
  %v683 = vpop.xlane.xlu0 %682
  %v684 = vsel %vm467, %v613, 0.0
  %685 = vadd.xlane.f32.xlu0 %v684
  %v686 = vpop.xlane.xlu0 %685
  %v687 = vsel %vm467, %v615, 0.0
  %688 = vadd.xlane.f32.xlu0 %v687
  %v689 = vpop.xlane.xlu0 %688
  %v690 = vsel %vm467, %v617, 0.0
  %691 = vadd.xlane.f32.xlu0 %v690
  %v692 = vpop.xlane.xlu0 %691
  %v693 = vsel %vm467, %v619, 0.0
  %694 = vadd.xlane.f32.xlu0 %v693
  %v695 = vpop.xlane.xlu0 %694
  %v696 = vsel %vm467, %v621, 0.0
  %697 = vadd.xlane.f32.xlu0 %v696
  %v698 = vpop.xlane.xlu0 %697
  %v699 = vsel %vm467, %v623, 0.0
  %700 = vadd.xlane.f32.xlu0 %v699
  %v701 = vpop.xlane.xlu0 %700
  %v702 = vsel %vm467, %v625, 0.0
  %703 = vadd.xlane.f32.xlu0 %v702
  %v704 = vpop.xlane.xlu0 %703
  %v705 = vsel %vm467, %v627, 0.0
  %706 = vadd.xlane.f32.xlu0 %v705
  %v707 = vpop.xlane.xlu0 %706
  %v708 = vsel %vm467, %v629, 0.0
  %709 = vadd.xlane.f32.xlu0 %v708
  %v710 = vpop.xlane.xlu0 %709
  %v711 = vsel %vm467, %v631, 0.0
  %712 = vadd.xlane.f32.xlu0 %v711
  %v713 = vpop.xlane.xlu0 %712
  %v714 = vsel %vm467, %v633, 0.0
  %715 = vadd.xlane.f32.xlu0 %v714
  %v716 = vpop.xlane.xlu0 %715
  %v717 = vsel %vm467, %v635, 0.0
  %718 = vadd.xlane.f32.xlu0 %v717
  %v719 = vpop.xlane.xlu0 %718
  %v720 = vsel %vm467, %v637, 0.0
  %721 = vadd.xlane.f32.xlu0 %v720
  %v722 = vpop.xlane.xlu0 %721
  %v723 = vsel %vm467, %v639, 0.0
  %724 = vadd.xlane.f32.xlu0 %v723
  %v725 = vpop.xlane.xlu0 %724
  %v726 = vsel %vm467, %v641, 0.0
  %727 = vadd.xlane.f32.xlu0 %v726
  %v728 = vpop.xlane.xlu0 %727
  %v729 = vsel %vm467, %v643, 0.0
  %730 = vadd.xlane.f32.xlu0 %v729
  %v731 = vpop.xlane.xlu0 %730
  %v732 = vsel %vm467, %v645, 0.0
  %733 = vadd.xlane.f32.xlu0 %v732
  %v734 = vpop.xlane.xlu0 %733
  %v735 = vsel %vm467, %v647, 0.0
  %736 = vadd.xlane.f32.xlu0 %v735
  %v737 = vpop.xlane.xlu0 %736
  %v738 = vsel %vm467, %v649, 0.0
  %739 = vadd.xlane.f32.xlu0 %v738
  %v740 = vpop.xlane.xlu0 %739
  %v741 = vsel %vm467, %v651, 0.0
  %742 = vadd.xlane.f32.xlu0 %v741
  %v743 = vpop.xlane.xlu0 %742
  %v744 = vsel %vm467, %v653, 0.0
  %745 = vadd.xlane.f32.xlu0 %v744
  %v746 = vpop.xlane.xlu0 %745
  %v747 = vsel %vm467, %v655, 0.0
  %748 = vadd.xlane.f32.xlu0 %v747
  %v749 = vpop.xlane.xlu0 %748
  %v750 = vsel %vm467, %v657, 0.0
  %751 = vadd.xlane.f32.xlu0 %v750
  %v752 = vpop.xlane.xlu0 %751
  %v753 = vsel %vm467, %v659, 0.0
  %754 = vadd.xlane.f32.xlu0 %v753
  %v755 = vpop.xlane.xlu0 %754
  %v756 = vlog2.pop %v662
  %v757 = vmul.f32 %v756, 0.6931472
  %v758 = vlog2.pop %v665
  %v759 = vmul.f32 %v758, 0.6931472
  %v760 = vlog2.pop %v668
  %v761 = vmul.f32 %v760, 0.6931472
  %v762 = vlog2.pop %v671
  %v763 = vmul.f32 %v762, 0.6931472
  %v764 = vlog2.pop %v674
  %v765 = vmul.f32 %v764, 0.6931472
  %v766 = vlog2.pop %v677
  %v767 = vmul.f32 %v766, 0.6931472
  %v768 = vlog2.pop %v680
  %v769 = vmul.f32 %v768, 0.6931472
  %v770 = vlog2.pop %v683
  %v771 = vmul.f32 %v770, 0.6931472
  %v772 = vlog2.pop %v686
  %v773 = vmul.f32 %v772, 0.6931472
  %v774 = vlog2.pop %v689
  %v775 = vmul.f32 %v774, 0.6931472
  %v776 = vlog2.pop %v692
  %v777 = vmul.f32 %v776, 0.6931472
  %v778 = vlog2.pop %v695
  %v779 = vmul.f32 %v778, 0.6931472
  %v780 = vlog2.pop %v698
  %v781 = vmul.f32 %v780, 0.6931472
  %v782 = vlog2.pop %v701
  %v783 = vmul.f32 %v782, 0.6931472
  %v784 = vlog2.pop %v704
  %v785 = vmul.f32 %v784, 0.6931472
  %v786 = vlog2.pop %v707
  %v787 = vmul.f32 %v786, 0.6931472
  %v788 = vlog2.pop %v710
  %v789 = vmul.f32 %v788, 0.6931472
  %v790 = vlog2.pop %v713
  %v791 = vmul.f32 %v790, 0.6931472
  %v792 = vlog2.pop %v716
  %v793 = vmul.f32 %v792, 0.6931472
  %v794 = vlog2.pop %v719
  %v795 = vmul.f32 %v794, 0.6931472
  %v796 = vlog2.pop %v722
  %v797 = vmul.f32 %v796, 0.6931472
  %v798 = vlog2.pop %v725
  %v799 = vmul.f32 %v798, 0.6931472
  %v800 = vlog2.pop %v728
  %v801 = vmul.f32 %v800, 0.6931472
  %v802 = vlog2.pop %v731
  %v803 = vmul.f32 %v802, 0.6931472
  %v804 = vlog2.pop %v734
  %v805 = vmul.f32 %v804, 0.6931472
  %v806 = vlog2.pop %v737
  %v807 = vmul.f32 %v806, 0.6931472
  %v808 = vlog2.pop %v740
  %v809 = vmul.f32 %v808, 0.6931472
  %v810 = vlog2.pop %v743
  %v811 = vmul.f32 %v810, 0.6931472
  %v812 = vlog2.pop %v746
  %v813 = vmul.f32 %v812, 0.6931472
  %v814 = vlog2.pop %v749
  %v815 = vmul.f32 %v814, 0.6931472
  %v816 = vlog2.pop %v752
  %v817 = vmul.f32 %v816, 0.6931472
  %v818 = vlog2.pop %v755
  %v819 = vmul.f32 %v818, 0.6931472
  %v820 = vadd.f32 %v470, %v757
  %v821 = vadd.f32 %v473, %v759
  %v822 = vadd.f32 %v476, %v761
  %v823 = vadd.f32 %v479, %v763
  %v824 = vadd.f32 %v482, %v765
  %v825 = vadd.f32 %v485, %v767
  %v826 = vadd.f32 %v488, %v769
  %v827 = vadd.f32 %v491, %v771
  %v828 = vadd.f32 %v494, %v773
  %v829 = vadd.f32 %v497, %v775
  %v830 = vadd.f32 %v500, %v777
  %v831 = vadd.f32 %v503, %v779
  %v832 = vadd.f32 %v506, %v781
  %v833 = vadd.f32 %v509, %v783
  %v834 = vadd.f32 %v512, %v785
  %v835 = vadd.f32 %v515, %v787
  %v836 = vadd.f32 %v518, %v789
  %v837 = vadd.f32 %v521, %v791
  %v838 = vadd.f32 %v524, %v793
  %v839 = vadd.f32 %v527, %v795
  %v840 = vadd.f32 %v530, %v797
  %v841 = vadd.f32 %v533, %v799
  %v842 = vadd.f32 %v536, %v801
  %v843 = vadd.f32 %v539, %v803
  %v844 = vadd.f32 %v542, %v805
  %v845 = vadd.f32 %v545, %v807
  %v846 = vadd.f32 %v548, %v809
  %v847 = vadd.f32 %v551, %v811
  %v848 = vadd.f32 %v554, %v813
  %v849 = vadd.f32 %v557, %v815
  %v850 = vadd.f32 %v560, %v817
  %v851 = vadd.f32 %v563, %v819
  %v852 = vsub.f32 %v435, %v820
  %v853 = vsub.f32 %v436, %v821
  %v854 = vsub.f32 %v437, %v822
  %v855 = vsub.f32 %v438, %v823
  %v856 = vsub.f32 %v439, %v824
  %v857 = vsub.f32 %v440, %v825
  %v858 = vsub.f32 %v441, %v826
  %v859 = vsub.f32 %v442, %v827
  %v860 = vsub.f32 %v443, %v828
  %v861 = vsub.f32 %v444, %v829
  %v862 = vsub.f32 %v445, %v830
  %v863 = vsub.f32 %v446, %v831
  %v864 = vsub.f32 %v447, %v832
  %v865 = vsub.f32 %v448, %v833
  %v866 = vsub.f32 %v449, %v834
  %v867 = vsub.f32 %v450, %v835
  %v868 = vsub.f32 %v451, %v836
  %v869 = vsub.f32 %v452, %v837
  %v870 = vsub.f32 %v453, %v838
  %v871 = vsub.f32 %v454, %v839
  %v872 = vsub.f32 %v455, %v840
  %v873 = vsub.f32 %v456, %v841
  %v874 = vsub.f32 %v457, %v842
  %v875 = vsub.f32 %v458, %v843
  %v876 = vsub.f32 %v459, %v844
  %v877 = vsub.f32 %v460, %v845
  %v878 = vsub.f32 %v461, %v846
  %v879 = vsub.f32 %v462, %v847
  %v880 = vsub.f32 %v463, %v848
  %v881 = vsub.f32 %v464, %v849
  %v882 = vsub.f32 %v465, %v850
  %v883 = vsub.f32 %v466, %v851
  %884 = vst.msk [vmem:[%s4] sm:$0xff] %vm467, %v852
  %885 = vst.msk [vmem:[%s4 + $0x8] sm:$0xff] %vm467, %v853
  %886 = vst.msk [vmem:[%s4 + $0x10] sm:$0xff] %vm467, %v854
  %887 = vst.msk [vmem:[%s4 + $0x18] sm:$0xff] %vm467, %v855
  %888 = vst.msk [vmem:[%s4 + $0x20] sm:$0xff] %vm467, %v856
  %889 = vst.msk [vmem:[%s4 + $0x28] sm:$0xff] %vm467, %v857
  %890 = vst.msk [vmem:[%s4 + $0x30] sm:$0xff] %vm467, %v858
  %891 = vst.msk [vmem:[%s4 + $0x38] sm:$0xff] %vm467, %v859
  %892 = vst.msk [vmem:[%s4 + $0x40] sm:$0xff] %vm467, %v860
  %893 = vst.msk [vmem:[%s4 + $0x48] sm:$0xff] %vm467, %v861
  %894 = vst.msk [vmem:[%s4 + $0x50] sm:$0xff] %vm467, %v862
  %895 = vst.msk [vmem:[%s4 + $0x58] sm:$0xff] %vm467, %v863
  %896 = vst.msk [vmem:[%s4 + $0x60] sm:$0xff] %vm467, %v864
  %897 = vst.msk [vmem:[%s4 + $0x68] sm:$0xff] %vm467, %v865
  %898 = vst.msk [vmem:[%s4 + $0x70] sm:$0xff] %vm467, %v866
  %899 = vst.msk [vmem:[%s4 + $0x78] sm:$0xff] %vm467, %v867
  %900 = vst.msk [vmem:[%s4 + $0x80] sm:$0xff] %vm467, %v868
  %901 = vst.msk [vmem:[%s4 + $0x88] sm:$0xff] %vm467, %v869
  %902 = vst.msk [vmem:[%s4 + $0x90] sm:$0xff] %vm467, %v870
  %903 = vst.msk [vmem:[%s4 + $0x98] sm:$0xff] %vm467, %v871
  %904 = vst.msk [vmem:[%s4 + $0xa0] sm:$0xff] %vm467, %v872
  %905 = vst.msk [vmem:[%s4 + $0xa8] sm:$0xff] %vm467, %v873
  %906 = vst.msk [vmem:[%s4 + $0xb0] sm:$0xff] %vm467, %v874
  %907 = vst.msk [vmem:[%s4 + $0xb8] sm:$0xff] %vm467, %v875
  %908 = vst.msk [vmem:[%s4 + $0xc0] sm:$0xff] %vm467, %v876
  %909 = vst.msk [vmem:[%s4 + $0xc8] sm:$0xff] %vm467, %v877
  %910 = vst.msk [vmem:[%s4 + $0xd0] sm:$0xff] %vm467, %v878
  %911 = vst.msk [vmem:[%s4 + $0xd8] sm:$0xff] %vm467, %v879
  %912 = vst.msk [vmem:[%s4 + $0xe0] sm:$0xff] %vm467, %v880
  %913 = vst.msk [vmem:[%s4 + $0xe8] sm:$0xff] %vm467, %v881
  %914 = vst.msk [vmem:[%s4 + $0xf0] sm:$0xff] %vm467, %v882
  %915 = vst.msk [vmem:[%s4 + $0xf8] sm:$0xff] %vm467, %v883
  // Predicated region
  $region18: #{tpu_custom_call.1} parent=0 // pred_check
    _
  $region19: #{tpu_custom_call.1} parent=0 // pred_check_branch
    %917 = sbr.rel (0) target = $region21
  $region20: #{tpu_custom_call.1} parent=0 // pred_region
    _
  $region21: #{tpu_custom_call.1} parent=0 // pred_fallthru
    _
  // Predicated region
  $region22: #{tpu_custom_call.1} parent=0 // pred_check
    _
  $region23: #{tpu_custom_call.1} parent=0 // pred_check_branch
    %919 = sbr.rel (0) target = $region25
  $region24: #{tpu_custom_call.1} parent=0 // pred_region
    _
  $region25: #{tpu_custom_call.1} parent=0 // pred_fallthru
    _

</llo_original>
